<compile_context>
chip_gen: v6e
topology: v6e:2x2x1
jax: 0.10.0
libtpu: 0.0.40
codegen_flags: <defaults>
</compile_context>

<pallas_src>
import functools

import jax
import jax.numpy as jnp
from jax import lax
from jax.experimental import pallas as pl
from jax.experimental.pallas import tpu as pltpu


def _attention_block(q, k, v, mask, o_ref, a_ref, temperature):
    # q: (Tq, Dk), k: (Lk, Dk), v: (Lk, Dv), mask: (Tq, Lk) int8 or None.
    # scores = (q @ k^T) / T  -> (Tq, Lk); contraction expressed directly on
    # k's last dim (no in-VMEM transpose), f32 accumulation on the MXU.
    scores = lax.dot_general(
        q, k,
        dimension_numbers=(((1,), (1,)), ((), ())),
        preferred_element_type=jnp.float32,
    )
    scores = scores * jnp.float32(1.0 / temperature)

    if mask is not None:
        # masked_fill(mask == 0, -1e9)
        scores = jnp.where(mask != 0, scores, jnp.float32(-1000000000.0))

    # numerically-stable softmax over the key dim, in f32
    s_max = jnp.max(scores, axis=-1, keepdims=True)
    e = jnp.exp(scores - s_max)
    denom = jnp.sum(e, axis=-1, keepdims=True)
    attn = e * pl.reciprocal(denom, approx=False)

    a_ref[...] = attn.astype(a_ref.dtype)

    # output = attn @ v  -> (Tq, Dv); feed the MXU v in its native dtype.
    o_ref[...] = jnp.dot(
        attn.astype(v.dtype), v, preferred_element_type=jnp.float32
    ).astype(o_ref.dtype)


def _sdpa_masked_kernel(q_ref, k_ref, v_ref, mask_ref, o_ref, a_ref, *, temperature):
    _attention_block(q_ref[...], k_ref[...], v_ref[...], mask_ref[...],
                     o_ref, a_ref, temperature)


def _sdpa_nomask_kernel(q_ref, k_ref, v_ref, o_ref, a_ref, *, temperature):
    _attention_block(q_ref[...], k_ref[...], v_ref[...], None,
                     o_ref, a_ref, temperature)


def _choose_q_tile(lq):
    """Largest convenient q-tile that exactly divides Lq (keeps blocks legal)."""
    if lq <= 256:
        return lq
    for t in (256, 128, 512):
        if lq % t == 0:
            return t
    return lq  # fall back to full extent (always a legal block shape)


def scaled_dot_product_attention(q, k, v, mask=None, *, temperature):
    """Pallas SDPA. q,k,v: (B,H,L,D); mask: (B,1,Lq,Lk) or None."""
    B, H, Lq, Dk = q.shape
    _, _, Lk, _ = k.shape
    Dv = v.shape[-1]

    tile_q = _choose_q_tile(Lq)
    n_q = Lq // tile_q
    grid = (B, H, n_q)

    # k / v index_maps ignore the q-tile axis -> blocks stay resident across it.
    in_specs = [
        pl.BlockSpec((None, None, tile_q, Dk), lambda b, h, qi: (b, h, qi, 0)),
        pl.BlockSpec((None, None, Lk, Dk), lambda b, h, qi: (b, h, 0, 0)),
        pl.BlockSpec((None, None, Lk, Dv), lambda b, h, qi: (b, h, 0, 0)),
    ]
    args = [q, k, v]

    mask_bytes = 0
    if mask is not None:
        mask_i8 = (mask != 0).astype(jnp.int8)  # 4x less HBM traffic than int32
        in_specs.append(
            pl.BlockSpec((None, None, tile_q, Lk), lambda b, h, qi: (b, 0, qi, 0))
        )
        args.append(mask_i8)
        mask_bytes = B * Lq * Lk  # int8
        kernel = functools.partial(_sdpa_masked_kernel, temperature=float(temperature))
    else:
        kernel = functools.partial(_sdpa_nomask_kernel, temperature=float(temperature))

    out_specs = [
        pl.BlockSpec((None, None, tile_q, Dv), lambda b, h, qi: (b, h, qi, 0)),
        pl.BlockSpec((None, None, tile_q, Lk), lambda b, h, qi: (b, h, qi, 0)),
    ]

    itemsize = jnp.dtype(q.dtype).itemsize
    cost = pl.CostEstimate(
        flops=2 * B * H * Lq * Lk * (Dk + Dv),
        transcendentals=B * H * Lq * Lk,
        bytes_accessed=(
            q.size * itemsize + k.size * jnp.dtype(k.dtype).itemsize
            + v.size * jnp.dtype(v.dtype).itemsize + mask_bytes
            + B * H * Lq * Dv * itemsize + B * H * Lq * Lk * itemsize
        ),
    )

    out, attn = pl.pallas_call(
        kernel,
        out_shape=(
            jax.ShapeDtypeStruct((B, H, Lq, Dv), q.dtype),
            jax.ShapeDtypeStruct((B, H, Lq, Lk), q.dtype),
        ),
        grid_spec=pltpu.PrefetchScalarGridSpec(
            num_scalar_prefetch=0,
            grid=grid,
            in_specs=in_specs,
            out_specs=out_specs,
        ),
        compiler_params=pltpu.CompilerParams(
            dimension_semantics=("parallel", "parallel", "arbitrary"),
            vmem_limit_bytes=32 * 1024 * 1024,
        ),
        cost_estimate=cost,
    )(*args)
    return out, attn


def _reference(q, k, v, mask, temperature):
    q32 = q.astype(jnp.float32)
    k32 = k.astype(jnp.float32)
    v32 = v.astype(jnp.float32)
    attn = jnp.matmul(q32 / temperature, jnp.swapaxes(k32, 2, 3))
    if mask is not None:
        attn = jnp.where(mask == 0, jnp.float32(-1000000000.0), attn)
    attn = jax.nn.softmax(attn, axis=-1)
    out = jnp.matmul(attn, v32)
    return out, attn


if __name__ == "__main__":
    key = jax.random.PRNGKey(0)
    kq, kk, kv, km, kq2, kk2, kv2, km2 = jax.random.split(key, 8)

    # ---- case 1: small f32, with mask (module-sized demo shapes) ----
    B, H, Lq, Lk, Dk, Dv = 2, 2, 8, 8, 32, 32
    temperature = float(Dk) ** 0.5
    q = jax.random.normal(kq, (B, H, Lq, Dk), dtype=jnp.float32)
    k = jax.random.normal(kk, (B, H, Lk, Dk), dtype=jnp.float32)
    v = jax.random.normal(kv, (B, H, Lk, Dv), dtype=jnp.float32)
    mask = (jax.random.uniform(km, (B, 1, Lq, Lk)) > 0.2).astype(jnp.int32)

    out, attn = scaled_dot_product_attention(q, k, v, mask, temperature=temperature)
    out, attn = jax.block_until_ready((out, attn))
    ref_out, ref_attn = _reference(q, k, v, mask, temperature)
    assert jnp.allclose(out, ref_out, atol=2e-5, rtol=2e-5), "output mismatch (masked)"
    assert jnp.allclose(attn, ref_attn, atol=2e-5, rtol=2e-5), "attn mismatch (masked)"

    # ---- case 2: same inputs, no mask (dedicated kernel, no synthetic ones) ----
    out2, attn2 = scaled_dot_product_attention(q, k, v, None, temperature=temperature)
    out2, attn2 = jax.block_until_ready((out2, attn2))
    ref_out2, ref_attn2 = _reference(q, k, v, None, temperature)
    assert jnp.allclose(out2, ref_out2, atol=2e-5, rtol=2e-5), "output mismatch (no mask)"
    assert jnp.allclose(attn2, ref_attn2, atol=2e-5, rtol=2e-5), "attn mismatch (no mask)"

    # ---- case 3: bf16, longer sequence -> exercises q-tiling (512 -> 2x256) ----
    B2, H2, Lq2, Lk2, Dk2, Dv2 = 1, 2, 512, 256, 64, 64
    temperature2 = float(Dk2) ** 0.5
    qb = jax.random.normal(kq2, (B2, H2, Lq2, Dk2), dtype=jnp.bfloat16)
    kb = jax.random.normal(kk2, (B2, H2, Lk2, Dk2), dtype=jnp.bfloat16)
    vb = jax.random.normal(kv2, (B2, H2, Lk2, Dv2), dtype=jnp.bfloat16)
    maskb = (jax.random.uniform(km2, (B2, 1, Lq2, Lk2)) > 0.1).astype(jnp.int32)

    out3, attn3 = scaled_dot_product_attention(qb, kb, vb, maskb, temperature=temperature2)
    out3, attn3 = jax.block_until_ready((out3, attn3))
    ref_out3, ref_attn3 = _reference(qb, kb, vb, maskb, temperature2)
    assert jnp.allclose(out3.astype(jnp.float32), ref_out3, atol=2e-2, rtol=2e-2), \
        "output mismatch (bf16 tiled)"
    assert jnp.allclose(attn3.astype(jnp.float32), ref_attn3, atol=2e-2, rtol=2e-2), \
        "attn mismatch (bf16 tiled)"

    print("KERNEL_OK")
</pallas_src>

<mosaic_0001>
module attributes {stable_mosaic.version = 11 : i64} {
  func.func @_sdpa_masked_kernel(%arg0: i32, %arg1: i32, %arg2: i32, %arg3: memref<1x1x8x32xf32, #tpu.memory_space<vmem>>, %arg4: memref<1x1x8x32xf32, #tpu.memory_space<vmem>>, %arg5: memref<1x1x8x32xf32, #tpu.memory_space<vmem>>, %arg6: memref<1x1x8x8xi8, #tpu.memory_space<vmem>>, %arg7: memref<1x1x8x32xf32, #tpu.memory_space<vmem>>, %arg8: memref<1x1x8x8xf32, #tpu.memory_space<vmem>>) attributes {dimension_semantics = [#tpu.dimension_semantics<parallel>, #tpu.dimension_semantics<parallel>, #tpu.dimension_semantics<arbitrary>], iteration_bounds = array<i64: 2, 2, 1>, scalar_prefetch = 0 : i64, scratch_operands = 0 : i64, tpu.core_type = #tpu.core_type<tc>, window_params = [{transform_indices = @transform_0, window_bounds = array<i64: 1, 1, 8, 32>}, {transform_indices = @transform_1, window_bounds = array<i64: 1, 1, 8, 32>}, {transform_indices = @transform_2, window_bounds = array<i64: 1, 1, 8, 32>}, {transform_indices = @transform_3, window_bounds = array<i64: 1, 1, 8, 8>}, {transform_indices = @transform_4, window_bounds = array<i64: 1, 1, 8, 32>}, {transform_indices = @transform_5, window_bounds = array<i64: 1, 1, 8, 8>}]} {
    %c0 = arith.constant 0 : index
    %c0_0 = arith.constant 0 : index
    %c0_1 = arith.constant 0 : index
    %c0_2 = arith.constant 0 : index
    %0 = vector.load %arg3[%c0, %c0_0, %c0_1, %c0_2] : memref<1x1x8x32xf32, #tpu.memory_space<vmem>>, vector<1x1x8x32xf32>
    %1 = vector.shape_cast %0 : vector<1x1x8x32xf32> to vector<8x32xf32>
    %c0_3 = arith.constant 0 : index
    %c0_4 = arith.constant 0 : index
    %c0_5 = arith.constant 0 : index
    %c0_6 = arith.constant 0 : index
    %2 = vector.load %arg4[%c0_3, %c0_4, %c0_5, %c0_6] : memref<1x1x8x32xf32, #tpu.memory_space<vmem>>, vector<1x1x8x32xf32>
    %3 = vector.shape_cast %2 : vector<1x1x8x32xf32> to vector<8x32xf32>
    %c0_7 = arith.constant 0 : index
    %c0_8 = arith.constant 0 : index
    %c0_9 = arith.constant 0 : index
    %c0_10 = arith.constant 0 : index
    %4 = vector.load %arg5[%c0_7, %c0_8, %c0_9, %c0_10] : memref<1x1x8x32xf32, #tpu.memory_space<vmem>>, vector<1x1x8x32xf32>
    %5 = vector.shape_cast %4 : vector<1x1x8x32xf32> to vector<8x32xf32>
    %c0_11 = arith.constant 0 : index
    %c0_12 = arith.constant 0 : index
    %c0_13 = arith.constant 0 : index
    %c0_14 = arith.constant 0 : index
    %6 = vector.load %arg6[%c0_11, %c0_12, %c0_13, %c0_14] : memref<1x1x8x8xi8, #tpu.memory_space<vmem>>, vector<1x1x8x8xi8>
    %7 = vector.shape_cast %6 : vector<1x1x8x8xi8> to vector<8x8xi8>
    %cst = arith.constant dense<0.000000e+00> : vector<8x8xf32>
    %8 = tpu.matmul %1, %3, %cst {dimension_numbers = #tpu.dot_dimension_numbers<[1], [1], [0], [0], [0, 0, 1, 0], [], []>} : vector<8x32xf32>, vector<8x32xf32>, vector<8x8xf32> -> vector<8x8xf32>
    %cst_15 = arith.constant 0.176776692 : f32
    %9 = vector.broadcast %cst_15 : f32 to vector<8x8xf32>
    %10 = arith.mulf %8, %9 : vector<8x8xf32>
    %c0_i8 = arith.constant 0 : i8
    %11 = vector.broadcast %c0_i8 : i8 to vector<8x8xi8>
    %12 = arith.cmpi ne, %7, %11 : vector<8x8xi8>
    %cst_16 = arith.constant -1.000000e+09 : f32
    %13 = vector.broadcast %cst_16 : f32 to vector<8x8xf32>
    %14 = arith.select %12, %10, %13 : vector<8x8xi1>, vector<8x8xf32>
    %cst_17 = arith.constant dense<0xFF800000> : vector<8xf32>
    %15 = vector.multi_reduction <maximumf>, %14, %cst_17 [1] : vector<8x8xf32> to vector<8xf32>
    %16 = vector.shape_cast %15 : vector<8xf32> to vector<8x1xf32>
    %17 = vector.broadcast %16 : vector<8x1xf32> to vector<8x8xf32>
    %18 = arith.subf %14, %17 : vector<8x8xf32>
    %19 = math.exp %18 : vector<8x8xf32>
    %cst_18 = arith.constant dense<0.000000e+00> : vector<8xf32>
    %20 = vector.multi_reduction <add>, %19, %cst_18 [1] : vector<8x8xf32> to vector<8xf32>
    %21 = vector.shape_cast %20 : vector<8xf32> to vector<8x1xf32>
    %22 = tpu.reciprocal %21 : vector<8x1xf32> -> vector<8x1xf32>
    %23 = vector.broadcast %22 : vector<8x1xf32> to vector<8x8xf32>
    %24 = arith.mulf %19, %23 : vector<8x8xf32>
    %c0_19 = arith.constant 0 : index
    %c0_20 = arith.constant 0 : index
    %c0_21 = arith.constant 0 : index
    %c0_22 = arith.constant 0 : index
    %25 = vector.load %arg8[%c0_19, %c0_20, %c0_21, %c0_22] : memref<1x1x8x8xf32, #tpu.memory_space<vmem>>, vector<1x1x8x8xf32>
    %26 = vector.shape_cast %25 : vector<1x1x8x8xf32> to vector<8x8xf32>
    %27 = vector.shape_cast %24 : vector<8x8xf32> to vector<1x1x8x8xf32>
    tpu.vector_store %arg8[%c0_19, %c0_20, %c0_21, %c0_22], %27 {strides = array<i32>} : memref<1x1x8x8xf32, #tpu.memory_space<vmem>>, vector<1x1x8x8xf32>,
    %cst_23 = arith.constant dense<0.000000e+00> : vector<8x32xf32>
    %28 = tpu.matmul %24, %5, %cst_23 {dimension_numbers = #tpu.dot_dimension_numbers<[1], [0], [0], [1], [0, 0, 1, 1], [], []>} : vector<8x8xf32>, vector<8x32xf32>, vector<8x32xf32> -> vector<8x32xf32>
    %c0_24 = arith.constant 0 : index
    %c0_25 = arith.constant 0 : index
    %c0_26 = arith.constant 0 : index
    %c0_27 = arith.constant 0 : index
    %29 = vector.load %arg7[%c0_24, %c0_25, %c0_26, %c0_27] : memref<1x1x8x32xf32, #tpu.memory_space<vmem>>, vector<1x1x8x32xf32>
    %30 = vector.shape_cast %29 : vector<1x1x8x32xf32> to vector<8x32xf32>
    %31 = vector.shape_cast %28 : vector<8x32xf32> to vector<1x1x8x32xf32>
    tpu.vector_store %arg7[%c0_24, %c0_25, %c0_26, %c0_27], %31 {strides = array<i32>} : memref<1x1x8x32xf32, #tpu.memory_space<vmem>>, vector<1x1x8x32xf32>,
    return
  }
  func.func @transform_0(%arg0: i32, %arg1: i32, %arg2: i32) -> (i32, i32, i32, i32) {
    %c0_i32 = arith.constant 0 : i32
    %c0_i32_0 = arith.constant 0 : i32
    return %arg0, %arg1, %arg2, %c0_i32 : i32, i32, i32, i32
  }
  func.func @transform_1(%arg0: i32, %arg1: i32, %arg2: i32) -> (i32, i32, i32, i32) {
    %c0_i32 = arith.constant 0 : i32
    %c0_i32_0 = arith.constant 0 : i32
    %c0_i32_1 = arith.constant 0 : i32
    return %arg0, %arg1, %c0_i32, %c0_i32_0 : i32, i32, i32, i32
  }
  func.func @transform_2(%arg0: i32, %arg1: i32, %arg2: i32) -> (i32, i32, i32, i32) {
    %c0_i32 = arith.constant 0 : i32
    %c0_i32_0 = arith.constant 0 : i32
    %c0_i32_1 = arith.constant 0 : i32
    return %arg0, %arg1, %c0_i32, %c0_i32_0 : i32, i32, i32, i32
  }
  func.func @transform_3(%arg0: i32, %arg1: i32, %arg2: i32) -> (i32, i32, i32, i32) {
    %c0_i32 = arith.constant 0 : i32
    %c0_i32_0 = arith.constant 0 : i32
    %c0_i32_1 = arith.constant 0 : i32
    return %arg0, %c0_i32, %arg2, %c0_i32_0 : i32, i32, i32, i32
  }
  func.func @transform_4(%arg0: i32, %arg1: i32, %arg2: i32) -> (i32, i32, i32, i32) {
    %c0_i32 = arith.constant 0 : i32
    %c0_i32_0 = arith.constant 0 : i32
    return %arg0, %arg1, %arg2, %c0_i32 : i32, i32, i32, i32
  }
  func.func @transform_5(%arg0: i32, %arg1: i32, %arg2: i32) -> (i32, i32, i32, i32) {
    %c0_i32 = arith.constant 0 : i32
    %c0_i32_0 = arith.constant 0 : i32
    return %arg0, %arg1, %arg2, %c0_i32 : i32, i32, i32, i32
  }
}

</mosaic_0001>

<llo_original>
// kernel: tpu_custom_call.1
$region0: #{tpu_custom_call.1}
  #allocation0 [shape = 'u32[]', space=smem, size = 0x4, offset = 0x4, fixed_abs, tag = 'smem constant byte address 0x4 - core index']
  #allocation1 [shape = 'u32[144,128]{1,0:T(1,128)}', space=vmem, size = 0x12000, scoped, tag = 'internal scratch']
  %s0 = inlined_call_operand.hbm [shape: f32[2,2,8,32], index: 0, kind: input, shape index: {}]
  %s1 = inlined_call_operand.hbm [shape: f32[2,2,8,32], index: 1, kind: input, shape index: {}]
  %s2 = inlined_call_operand.hbm [shape: f32[2,2,8,32], index: 2, kind: input, shape index: {}]
  %s3 = inlined_call_operand.vmem [shape: s8[2,1,8,8], index: 3, kind: input, shape index: {}]
  %s4 = inlined_call_operand.hbm [shape: f32[2,2,8,32], index: 4, kind: output, shape index: {0}]
  %s5 = inlined_call_operand.hbm [shape: f32[2,2,8,8], index: 5, kind: output, shape index: {1}]
  %6 = xla_tuple %s4, %s5
  %s7 = sld [smem:[#allocation0]]
  $region69: #{tpu_custom_call.1} parent=0
    _
  %s9 = ssub.s32 1, %s7
  %s10 = scalar_select 0, %s9, %s7
  $region1: #{tpu_custom_call.1} parent=0
    #allocation2 [shape = 'u8[8192]{0}', space=vmem, size = 0x2000, scoped, tag = 'input window, operand 0']
    #allocation3 [shape = 's32[2]{0}', space=sflag, size = 0x8, scoped, tag = 'scoped memory for tpu_custom_call.1']
    #allocation4 [shape = 's32[2]{0}', space=sflag, size = 0x8, scoped, tag = 'scoped memory for tpu_custom_call.1']
    #allocation5 [shape = 'u8[8192]{0}', space=vmem, size = 0x2000, scoped, tag = 'input window, operand 1']
    #allocation6 [shape = 's32[2]{0}', space=sflag, size = 0x8, scoped, tag = 'scoped memory for tpu_custom_call.1']
    #allocation7 [shape = 'u8[8192]{0}', space=vmem, size = 0x2000, scoped, tag = 'input window, operand 2']
    #allocation8 [shape = 'u8[8192]{0}', space=vmem, size = 0x2000, scoped, tag = 'output window, operand 0']
    #allocation9 [shape = 'u8[8192]{0}', space=vmem, size = 0x2000, scoped, tag = 'output window, operand 1']
    #allocation10 [shape = 's32[2]{0}', space=sflag, size = 0x8, scoped, tag = 'scoped memory for tpu_custom_call.1']
    %11 = vsyncpa [#allocation3], 0
    %s12 = scalar_lea.sflag [#allocation3], 1
    %13 = vsyncpa %s12, 0
    %14 = vsyncpa [#allocation6], 0
    %s15 = scalar_lea.sflag [#allocation6], 1
    %16 = vsyncpa %s15, 0
    %17 = vsyncpa [#allocation4], 0
    %s18 = scalar_lea.sflag [#allocation4], 1
    %19 = vsyncpa %s18, 0
    %20 = vsyncpa [#allocation10], 0
    %s21 = scalar_lea.sflag [#allocation10], 1
    %22 = vsyncpa %s21, 0
    loop: start=0, step=1, limit=6
    $region2: #{tpu_custom_call.1} parent=1 // loop_pre_header
      _
    $region3: #{tpu_custom_call.1} parent=1 // loop_header
      %s24 = sphi 0, %s28
      %p25 = scmp.ge.s32.totalorder %s24, 6
      %s31 = sphi 0, %s50
      %s32 = sphi 0, %s46
      %s33 = sphi 0, %s42
      %s34 = sphi 0, %s31
      %s35 = sphi 0, %s32
      %s36 = sphi 0, %s33
      %s37 = sphi 0, %s34
      %s38 = sphi 0, %s35
      %s39 = sphi 0, %s36
      %s57 = sphi 0, %s59
      %s60 = sphi 0, %s57
      %s61 = sphi 0, %s60
      %s77 = sphi 0, %s61
      %s85 = sphi 0, %s87
      %s88 = sphi 0, %s85
      %s89 = sphi 0, %s88
      %s105 = sphi 0, %s89
      %s113 = sphi 0, %s115
      %s116 = sphi 0, %s113
      %s117 = sphi 0, %s116
      %s133 = sphi 0, %s117
      %s141 = sphi 0, %s143
      %s144 = sphi 0, %s141
      %s145 = sphi 0, %s144
      %s161 = sphi 0, %s145
      %s171 = sphi 0, %s173
      %s174 = sphi 0, %s171
      %s175 = sphi 0, %s174
      %s191 = sphi 0, %s175
      %s201 = sphi 0, %s203
      %s204 = sphi 0, %s201
      %s205 = sphi 0, %s204
      %s221 = sphi 0, %s205
    $region4: #{tpu_custom_call.1} parent=1 // loop_header_branch
      %27 = sbr.rel (%p25) target = $region8
    $region5: #{tpu_custom_call.1} parent=1 // loop_body
      %s29 = ssub.s32 %s24, 1
      %s30 = ssub.s32 %s24, 2
      %s40 = sadd.s32 1, %s33
      %p41 = scmp.ge.s32.totalorder %s40, 1
      %s42 = scalar_select %p41, 0, %s40
      %s43 = sadd.s32 1, %s32
      %s44 = scalar_select %p41, %s43, %s32
      %p45 = scmp.ge.s32.totalorder %s44, 2
      %s46 = scalar_select %p45, 0, %s44
      %s47 = sadd.s32 1, %s31
      %s48 = scalar_select %p45, %s47, %s31
      %p49 = scmp.ge.s32.totalorder %s48, 2
      %s50 = scalar_select %p49, 0, %s48
      %s51 = ssub.s32 %s31, %s50
      %s52 = ssub.s32 %s32, %s46
      %s53 = sor.u32 %s51, %s52
      %s54 = ssub.s32 %s33, %s42
      %s55 = sor.u32 %s53, %s54
      %p56 = scmp.eq.s32.totalorder %s55, 0
      %s58 = sadd.s32 %s57, 1
      %s59 = scalar_select %p56, %s57, %s58
      %p62 = pneg %p56
      %p63 = scmp.eq.s32.totalorder %s24, 3
      %p64 = por %p62, %p63
      %p65 = scmp.ne.s32.totalorder %s57, %s60
      %p66 = scmp.eq.s32.totalorder %s24, 0
      %p67 = por %p65, %p66
      %p68 = scmp.ne.s32.totalorder %s57, %s60
      %p69 = scmp.eq.s32.totalorder %s29, 3
      %p70 = por %p68, %p69
      %p71 = scmp.ne.s32.totalorder %s60, %s61
      %p72 = scmp.eq.s32.totalorder %s29, 0
      %p73 = por %p71, %p72
      %p74 = scmp.ne.s32.totalorder %s60, %s61
      %p75 = scmp.eq.s32.totalorder %s30, 3
      %p76 = por %p74, %p75
      %p78 = scmp.ne.s32.totalorder %s61, %s77
      %p79 = scmp.eq.s32.totalorder %s30, 0
      %p80 = por %p78, %p79
      %s81 = ssub.s32 %s31, %s50
      %s82 = ssub.s32 %s32, %s46
      %s83 = sor.u32 %s81, %s82
      %p84 = scmp.eq.s32.totalorder %s83, 0
      %s86 = sadd.s32 %s85, 1
      %s87 = scalar_select %p84, %s85, %s86
      %p90 = pneg %p84
      %p91 = scmp.eq.s32.totalorder %s24, 3
      %p92 = por %p90, %p91
      %p93 = scmp.ne.s32.totalorder %s85, %s88
      %p94 = scmp.eq.s32.totalorder %s24, 0
      %p95 = por %p93, %p94
      %p96 = scmp.ne.s32.totalorder %s85, %s88
      %p97 = scmp.eq.s32.totalorder %s29, 3
      %p98 = por %p96, %p97
      %p99 = scmp.ne.s32.totalorder %s88, %s89
      %p100 = scmp.eq.s32.totalorder %s29, 0
      %p101 = por %p99, %p100
      %p102 = scmp.ne.s32.totalorder %s88, %s89
      %p103 = scmp.eq.s32.totalorder %s30, 3
      %p104 = por %p102, %p103
      %p106 = scmp.ne.s32.totalorder %s89, %s105
      %p107 = scmp.eq.s32.totalorder %s30, 0
      %p108 = por %p106, %p107
      %s109 = ssub.s32 %s31, %s50
      %s110 = ssub.s32 %s32, %s46
      %s111 = sor.u32 %s109, %s110
      %p112 = scmp.eq.s32.totalorder %s111, 0
      %s114 = sadd.s32 %s113, 1
      %s115 = scalar_select %p112, %s113, %s114
      %p118 = pneg %p112
      %p119 = scmp.eq.s32.totalorder %s24, 3
      %p120 = por %p118, %p119
      %p121 = scmp.ne.s32.totalorder %s113, %s116
      %p122 = scmp.eq.s32.totalorder %s24, 0
      %p123 = por %p121, %p122
      %p124 = scmp.ne.s32.totalorder %s113, %s116
      %p125 = scmp.eq.s32.totalorder %s29, 3
      %p126 = por %p124, %p125
      %p127 = scmp.ne.s32.totalorder %s116, %s117
      %p128 = scmp.eq.s32.totalorder %s29, 0
      %p129 = por %p127, %p128
      %p130 = scmp.ne.s32.totalorder %s116, %s117
      %p131 = scmp.eq.s32.totalorder %s30, 3
      %p132 = por %p130, %p131
      %p134 = scmp.ne.s32.totalorder %s117, %s133
      %p135 = scmp.eq.s32.totalorder %s30, 0
      %p136 = por %p134, %p135
      %s137 = ssub.s32 %s31, %s50
      %s138 = ssub.s32 %s33, %s42
      %s139 = sor.u32 %s137, %s138
      %p140 = scmp.eq.s32.totalorder %s139, 0
      %s142 = sadd.s32 %s141, 1
      %s143 = scalar_select %p140, %s141, %s142
      %p146 = pneg %p140
      %p147 = scmp.eq.s32.totalorder %s24, 3
      %p148 = por %p146, %p147
      %p149 = scmp.ne.s32.totalorder %s141, %s144
      %p150 = scmp.eq.s32.totalorder %s24, 0
      %p151 = por %p149, %p150
      %p152 = scmp.ne.s32.totalorder %s141, %s144
      %p153 = scmp.eq.s32.totalorder %s29, 3
      %p154 = por %p152, %p153
      %p155 = scmp.ne.s32.totalorder %s144, %s145
      %p156 = scmp.eq.s32.totalorder %s29, 0
      %p157 = por %p155, %p156
      %p158 = scmp.ne.s32.totalorder %s144, %s145
      %p159 = scmp.eq.s32.totalorder %s30, 3
      %p160 = por %p158, %p159
      %p162 = scmp.ne.s32.totalorder %s145, %s161
      %p163 = scmp.eq.s32.totalorder %s30, 0
      %p164 = por %p162, %p163
      %s165 = ssub.s32 %s31, %s50
      %s166 = ssub.s32 %s32, %s46
      %s167 = sor.u32 %s165, %s166
      %s168 = ssub.s32 %s33, %s42
      %s169 = sor.u32 %s167, %s168
      %p170 = scmp.eq.s32.totalorder %s169, 0
      %s172 = sadd.s32 %s171, 1
      %s173 = scalar_select %p170, %s171, %s172
      %p176 = pneg %p170
      %p177 = scmp.eq.s32.totalorder %s24, 3
      %p178 = por %p176, %p177
      %p179 = scmp.ne.s32.totalorder %s171, %s174
      %p180 = scmp.eq.s32.totalorder %s24, 0
      %p181 = por %p179, %p180
      %p182 = scmp.ne.s32.totalorder %s171, %s174
      %p183 = scmp.eq.s32.totalorder %s29, 3
      %p184 = por %p182, %p183
      %p185 = scmp.ne.s32.totalorder %s174, %s175
      %p186 = scmp.eq.s32.totalorder %s29, 0
      %p187 = por %p185, %p186
      %p188 = scmp.ne.s32.totalorder %s174, %s175
      %p189 = scmp.eq.s32.totalorder %s30, 3
      %p190 = por %p188, %p189
      %p192 = scmp.ne.s32.totalorder %s175, %s191
      %p193 = scmp.eq.s32.totalorder %s30, 0
      %p194 = por %p192, %p193
      %s195 = ssub.s32 %s31, %s50
      %s196 = ssub.s32 %s32, %s46
      %s197 = sor.u32 %s195, %s196
      %s198 = ssub.s32 %s33, %s42
      %s199 = sor.u32 %s197, %s198
      %p200 = scmp.eq.s32.totalorder %s199, 0
      %s202 = sadd.s32 %s201, 1
      %s203 = scalar_select %p200, %s201, %s202
      %p206 = pneg %p200
      %p207 = scmp.eq.s32.totalorder %s24, 3
      %p208 = por %p206, %p207
      %p209 = scmp.ne.s32.totalorder %s201, %s204
      %p210 = scmp.eq.s32.totalorder %s24, 0
      %p211 = por %p209, %p210
      %p212 = scmp.ne.s32.totalorder %s201, %s204
      %p213 = scmp.eq.s32.totalorder %s29, 3
      %p214 = por %p212, %p213
      %p215 = scmp.ne.s32.totalorder %s204, %s205
      %p216 = scmp.eq.s32.totalorder %s29, 0
      %p217 = por %p215, %p216
      %p218 = scmp.ne.s32.totalorder %s204, %s205
      %p219 = scmp.eq.s32.totalorder %s30, 3
      %p220 = por %p218, %p219
      %p222 = scmp.ne.s32.totalorder %s205, %s221
      %p223 = scmp.eq.s32.totalorder %s30, 0
      %p224 = por %p222, %p223
      %p225 = scmp.le.s32.totalorder 1, %s24
      %p226 = scmp.lt.s32.totalorder %s24, 5
      %p227 = pnand %p225, %p226
      %p228 = pneg %p227
      // Predicated region
      $region9: #{tpu_custom_call.1} parent=5 // pred_check
        _
      $region10: #{tpu_custom_call.1} parent=5 // pred_check_branch
        %230 = sbr.rel (%p227) target = $region12
      $region11: #{tpu_custom_call.1} parent=5 // pred_region
        %s231 = ssub.s32 %s24, 1
      $region12: #{tpu_custom_call.1} parent=5 // pred_fallthru
        _
      %p232 = scmp.lt.s32.totalorder %s24, 4
      // Predicated region
      $region13: #{tpu_custom_call.1} parent=5 // pred_check
        %p233 = pneg %p232
      $region14: #{tpu_custom_call.1} parent=5 // pred_check_branch
        %235 = sbr.rel (%p233) target = $region16
      $region15: #{tpu_custom_call.1} parent=5 // pred_region
        // Predicated region
        $region17: #{tpu_custom_call.1} parent=15 // pred_check
          %p236 = pneg %p67
        $region18: #{tpu_custom_call.1} parent=15 // pred_check_branch
          %238 = sbr.rel (%p236) target = $region20
        $region19: #{tpu_custom_call.1} parent=15 // pred_region
          %s239 = sand.u32 %s57, 1
          %s240 = scalar_lea.sflag [#allocation3], %s239
          %s241 = sand.u32 %s57, 1
          %s242 = smul.addr %s241, 8
          %s243 = scalar_lea.vmem [#allocation2], %s242
          %s245 = ssub.s32 128, 128
          %246 = vsyncadd %s240, %s245
          %s247 = sadd.s32 %s33, %s32
          %s248 = smul.addr %s31, 2
          %s249 = sadd.s32 %s247, %s248
          %s250 = smul.addr %s249, 128
          %s251 = scalar_lea.hbm %s0, %s250
          %s253 = sshll.u32 %s243, 4
          %s254 = int_to_ptr.vmem [resolvable:$true] %s253
          %256 = dma.hbm_to_vmem [thread:$0]  %s251, 128, %s254, %s240
        $region20: #{tpu_custom_call.1} parent=15 // pred_fallthru
          _
        // Predicated region
        $region21: #{tpu_custom_call.1} parent=15 // pred_check
          %p257 = pneg %p95
        $region22: #{tpu_custom_call.1} parent=15 // pred_check_branch
          %259 = sbr.rel (%p257) target = $region24
        $region23: #{tpu_custom_call.1} parent=15 // pred_region
          %s260 = sand.u32 %s24, 1
          %s261 = scalar_lea.sflag [#allocation6], %s260
          %s262 = sand.u32 %s85, 1
          %s263 = smul.addr %s262, 8
          %s264 = scalar_lea.vmem [#allocation5], %s263
          %s266 = ssub.s32 128, 128
          %267 = vsyncadd %s261, %s266
          %s268 = smul.addr %s31, 2
          %s269 = sadd.s32 %s32, %s268
          %s270 = smul.addr %s269, 128
          %s271 = scalar_lea.hbm %s1, %s270
          %s273 = sshll.u32 %s264, 4
          %s274 = int_to_ptr.vmem [resolvable:$true] %s273
          %276 = dma.hbm_to_vmem [thread:$0]  %s271, 128, %s274, %s261
        $region24: #{tpu_custom_call.1} parent=15 // pred_fallthru
          _
        // Predicated region
        $region25: #{tpu_custom_call.1} parent=15 // pred_check
          %p277 = pneg %p123
        $region26: #{tpu_custom_call.1} parent=15 // pred_check_branch
          %279 = sbr.rel (%p277) target = $region28
        $region27: #{tpu_custom_call.1} parent=15 // pred_region
          %s280 = sand.u32 %s24, 1
          %s281 = scalar_lea.sflag [#allocation6], %s280
          %s282 = sand.u32 %s113, 1
          %s283 = smul.addr %s282, 8
          %s284 = scalar_lea.vmem [#allocation7], %s283
          %s286 = ssub.s32 128, 128
          %287 = vsyncadd %s281, %s286
          %s288 = smul.addr %s31, 2
          %s289 = sadd.s32 %s32, %s288
          %s290 = smul.addr %s289, 128
          %s291 = scalar_lea.hbm %s2, %s290
          %s293 = sshll.u32 %s284, 4
          %s294 = int_to_ptr.vmem [resolvable:$true] %s293
          %296 = dma.hbm_to_vmem [thread:$0]  %s291, 128, %s294, %s281
        $region28: #{tpu_custom_call.1} parent=15 // pred_fallthru
          _
        // Predicated region
        $region29: #{tpu_custom_call.1} parent=15 // pred_check
          %p297 = pneg %p151
        $region30: #{tpu_custom_call.1} parent=15 // pred_check_branch
          %299 = sbr.rel (%p297) target = $region32
        $region31: #{tpu_custom_call.1} parent=15 // pred_region
          %p300 = scmp.lt.s32.totalorder %s31, 1
          %s301 = scalar_select %p300, %s31, 1
          %p302 = scmp.lt.s32.totalorder %s33, 0
          %s303 = scalar_select %p302, %s33, 0
          %s304 = sadd.s32 %s303, %s301
          %s305 = smul.addr %s304, 2
          %s306 = scalar_lea.vmem %s3, %s305
        $region32: #{tpu_custom_call.1} parent=15 // pred_fallthru
          _
      $region16: #{tpu_custom_call.1} parent=5 // pred_fallthru
        _
      %p307 = scmp.le.s32.totalorder 1, %s24
      %p308 = scmp.lt.s32.totalorder %s24, 5
      %p309 = pnand %p307, %p308
      %p310 = pneg %p309
      // Predicated region
      $region33: #{tpu_custom_call.1} parent=5 // pred_check
        _
      $region34: #{tpu_custom_call.1} parent=5 // pred_check_branch
        %312 = sbr.rel (%p309) target = $region36
      $region35: #{tpu_custom_call.1} parent=5 // pred_region
        %s313 = ssub.s32 %s24, 1
        %s314 = sand.u32 %s60, 1
        %s315 = scalar_lea.sflag [#allocation3], %s314
        %s316 = sand.u32 %s60, 1
        %s317 = smul.addr %s316, 8
        %s318 = scalar_lea.vmem [#allocation2], %s317
        // Predicated region
        $region37: #{tpu_custom_call.1} parent=35 // pred_check
          %p319 = pneg %p73
        $region38: #{tpu_custom_call.1} parent=35 // pred_check_branch
          %321 = sbr.rel (%p319) target = $region40
        $region39: #{tpu_custom_call.1} parent=35 // pred_region
          %322 = dma.done %s315, 128
        $region40: #{tpu_custom_call.1} parent=35 // pred_fallthru
          _
        %s323 = sand.u32 %s29, 1
        %s324 = scalar_lea.sflag [#allocation6], %s323
        %s325 = sand.u32 %s88, 1
        %s326 = smul.addr %s325, 8
        %s327 = scalar_lea.vmem [#allocation5], %s326
        // Predicated region
        $region41: #{tpu_custom_call.1} parent=35 // pred_check
          %p328 = pneg %p101
        $region42: #{tpu_custom_call.1} parent=35 // pred_check_branch
          %330 = sbr.rel (%p328) target = $region44
        $region43: #{tpu_custom_call.1} parent=35 // pred_region
          %331 = dma.done %s324, 128
        $region44: #{tpu_custom_call.1} parent=35 // pred_fallthru
          _
        %s332 = sand.u32 %s29, 1
        %s333 = scalar_lea.sflag [#allocation6], %s332
        %s334 = sand.u32 %s116, 1
        %s335 = smul.addr %s334, 8
        %s336 = scalar_lea.vmem [#allocation7], %s335
        // Predicated region
        $region45: #{tpu_custom_call.1} parent=35 // pred_check
          %p337 = pneg %p129
        $region46: #{tpu_custom_call.1} parent=35 // pred_check_branch
          %339 = sbr.rel (%p337) target = $region48
        $region47: #{tpu_custom_call.1} parent=35 // pred_region
          %340 = dma.done %s333, 128
        $region48: #{tpu_custom_call.1} parent=35 // pred_fallthru
          _
        %s341 = sand.u32 %s60, 1
        %s342 = scalar_lea.sflag [#allocation3], %s341
        %s343 = sand.u32 %s60, 1
        %s344 = smul.addr %s343, 8
        %s345 = scalar_lea.vmem [#allocation2], %s344
        %p346 = pneg %p73
        %p347 = pneg %p70
        %s348 = sand.u32 %s29, 1
        %s349 = scalar_lea.sflag [#allocation6], %s348
        %s350 = sand.u32 %s88, 1
        %s351 = smul.addr %s350, 8
        %s352 = scalar_lea.vmem [#allocation5], %s351
        %p353 = pneg %p101
        %p354 = pneg %p98
        %s355 = sand.u32 %s29, 1
        %s356 = scalar_lea.sflag [#allocation6], %s355
        %s357 = sand.u32 %s116, 1
        %s358 = smul.addr %s357, 8
        %s359 = scalar_lea.vmem [#allocation7], %s358
        %p360 = pneg %p129
        %p361 = pneg %p126
        %p362 = scmp.lt.s32.totalorder %s34, 1
        %s363 = scalar_select %p362, %s34, 1
        %p364 = scmp.lt.s32.totalorder %s36, 0
        %s365 = scalar_select %p364, %s36, 0
        %s366 = sadd.s32 %s365, %s363
        %s367 = smul.addr %s366, 2
        %s368 = scalar_lea.vmem %s3, %s367
        %p369 = pneg %p157
        %p370 = pneg %p154
        %p371 = pneg %p187
        %p372 = pneg %p184
        %s373 = sand.u32 %s174, 1
        %s374 = scalar_lea.sflag [#allocation4], %s373
        %s375 = sand.u32 %s174, 1
        %s376 = smul.addr %s375, 8
        %s377 = scalar_lea.vmem [#allocation8], %s376
        %p378 = pneg %p217
        %p379 = pneg %p214
        %s380 = sand.u32 %s204, 1
        %s381 = scalar_lea.sflag [#allocation10], %s380
        %s382 = sand.u32 %s204, 1
        %s383 = smul.addr %s382, 8
        %s384 = scalar_lea.vmem [#allocation9], %s383
        %p385 = scmp.lt.s32.totalorder %s34, 1
        %s386 = scalar_select %p385, %s34, 1
        %p387 = scmp.lt.s32.totalorder %s36, 0
        %s388 = scalar_select %p387, %s36, 0
        %s389 = sadd.s32 %s388, %s386
        %s390 = smul.addr %s389, 2
        %s391 = scalar_lea.vmem %s3, %s390
        %v394 = vld [vmem:[%s318] sm:$0xff]
        %v395 = vld [vmem:[%s327] sm:$0xff]
        %v396 = vld [vmem:[%s336] sm:$0xff]
        %v397 = vld [vmem:[%s391] sm:$0x3]
        %vm398 = vcmask 261120
        %v400 = vsel %vm398, %v394, 0
        %v403 = vsel %vm398, %v395, 0
        %405 = vmatprep.subr.mxu0 0.0
        %406 = vmatpush1.xpose.msra.mxu0 0.0
        %407 = vmatprep.subr.mxu0 0.0
        %408 = vmatpush1.xpose.msra.mxu0 0.0
        %409 = vmatprep.subr.mxu0 0.0
        %410 = vmatpush1.xpose.msra.mxu0 0.0
        %411 = vmatprep.subr.mxu0 0.0
        %412 = vmatpush1.xpose.msra.mxu0 0.0
        %413 = vmatprep.subr.mxu0 0.0
        %414 = vmatpush1.xpose.msra.mxu0 0.0
        %415 = vmatprep.subr.mxu0 0.0
        %416 = vmatpush1.xpose.msra.mxu0 0.0
        %417 = vmatprep.subr.mxu0 0.0
        %418 = vmatpush1.xpose.msra.mxu0 0.0
        %419 = vmatprep.subr.mxu0 0.0
        %420 = vmatpush1.xpose.msra.mxu0 0.0
        %421 = vmatprep.subr.mxu0 0.0
        %422 = vmatpush1.xpose.msra.mxu0 0.0
        %423 = vmatprep.subr.mxu0 0.0
        %424 = vmatpush1.xpose.msra.mxu0 0.0
        %425 = vmatprep.subr.mxu0 0.0
        %426 = vmatpush1.xpose.msra.mxu0 0.0
        %427 = vmatprep.subr.mxu0 0.0
        %428 = vmatpush1.xpose.msra.mxu0 0.0
        %429 = vmatprep.subr.mxu0 0.0
        %430 = vmatpush1.xpose.msra.mxu0 0.0
        %431 = vmatprep.subr.mxu0 0.0
        %432 = vmatpush1.xpose.msra.mxu0 0.0
        %433 = vmatprep.subr.mxu0 0.0
        %434 = vmatpush1.xpose.msra.mxu0 0.0
        %435 = vmatprep.subr.mxu0 0.0
        %436 = vmatpush1.xpose.msra.mxu0 %v403
        %437 = vmatprep.subr.mxu0 0.0
        %438 = vmatpush2.xpose.msra.mxu0 0.0
        %439 = vmatprep.subr.mxu0 0.0
        %440 = vmatpush2.xpose.msra.mxu0 0.0
        %441 = vmatprep.subr.mxu0 0.0
        %442 = vmatpush2.xpose.msra.mxu0 0.0
        %443 = vmatprep.subr.mxu0 0.0
        %444 = vmatpush2.xpose.msra.mxu0 0.0
        %445 = vmatprep.subr.mxu0 0.0
        %446 = vmatpush2.xpose.msra.mxu0 0.0
        %447 = vmatprep.subr.mxu0 0.0
        %448 = vmatpush2.xpose.msra.mxu0 0.0
        %449 = vmatprep.subr.mxu0 0.0
        %450 = vmatpush2.xpose.msra.mxu0 0.0
        %451 = vmatprep.subr.mxu0 0.0
        %452 = vmatpush2.xpose.msra.mxu0 0.0
        %453 = vmatprep.subr.mxu0 0.0
        %454 = vmatpush2.xpose.msra.mxu0 0.0
        %455 = vmatprep.subr.mxu0 0.0
        %456 = vmatpush2.xpose.msra.mxu0 0.0
        %457 = vmatprep.subr.mxu0 0.0
        %458 = vmatpush2.xpose.msra.mxu0 0.0
        %459 = vmatprep.subr.mxu0 0.0
        %460 = vmatpush2.xpose.msra.mxu0 0.0
        %461 = vmatprep.subr.mxu0 0.0
        %462 = vmatpush2.xpose.msra.mxu0 0.0
        %463 = vmatprep.subr.mxu0 0.0
        %464 = vmatpush2.xpose.msra.mxu0 0.0
        %465 = vmatprep.subr.mxu0 0.0
        %466 = vmatpush2.xpose.msra.mxu0 0.0
        %467 = vmatprep.subr.mxu0 0.0
        %468 = vmatpush2.xpose.msra.mxu0 0.0
        %469 = vmatprep.mubr.f32.mxu0 0.0
        %470 = vmatmul.mubr.f32.gmra.mxu0 %v400
        %v471 = vpop.f32.mrf.mxu0
        %v472 = vadd.f32 0.0, %v471
        %v473 = vpop.f32.mrf.mxu0
        %474 = vdwg.mxu0
        %v475 = vmul.f32 %v472, 0.17677669
        %vm476 = vnez %v397
        %v477 = vsel %vm476, 16843009, 0
        %v478 = vunpack.c.0.s8 %v477
        %vm479 = vcmp.ne.s32.totalorder %v478, 0
        %v480 = vsel %vm479, %v475, -1e+09
        %vm481 = vcmask 64512
        %v482 = vsel %vm481, %v480, -inf
        %483 = vmax.xlane.f32.xlu0 %v482
        %v484 = vpop.xlane.xlu0 %483
        %v485 = vsub.f32 %v480, %v484
        %v486 = vmul.f32 %v485, 1.442695
        %v487 = vpow.pop %v486
        %v488 = vsel %vm481, %v487, 0.0
        %489 = vadd.xlane.f32.xlu0 %v488
        %v490 = vpop.xlane.xlu0 %489
        %v491 = vrcp.pop %v490
        %v492 = vmul.f32 %v487, %v491
        %493 = vst.msk [vmem:[%s384] sm:$0xff] %vm481, %v492
        %v495 = vsel %vm481, %v492, 0
        %497 = vmatprep.subr.mxu0 0.0
        %498 = vmatpush1.msra.mxu0 0.0
        %499 = vmatprep.subr.mxu0 0.0
        %500 = vmatpush1.msra.mxu0 0.0
        %501 = vmatprep.subr.mxu0 0.0
        %502 = vmatpush1.msra.mxu0 0.0
        %503 = vmatprep.subr.mxu0 0.0
        %504 = vmatpush1.msra.mxu0 0.0
        %505 = vmatprep.subr.mxu0 0.0
        %506 = vmatpush1.msra.mxu0 0.0
        %507 = vmatprep.subr.mxu0 0.0
        %508 = vmatpush1.msra.mxu0 0.0
        %509 = vmatprep.subr.mxu0 0.0
        %510 = vmatpush1.msra.mxu0 0.0
        %511 = vmatprep.subr.mxu0 0.0
        %512 = vmatpush1.msra.mxu0 0.0
        %513 = vmatprep.subr.mxu0 0.0
        %514 = vmatpush1.msra.mxu0 0.0
        %515 = vmatprep.subr.mxu0 0.0
        %516 = vmatpush1.msra.mxu0 0.0
        %517 = vmatprep.subr.mxu0 0.0
        %518 = vmatpush1.msra.mxu0 0.0
        %519 = vmatprep.subr.mxu0 0.0
        %520 = vmatpush1.msra.mxu0 0.0
        %521 = vmatprep.subr.mxu0 0.0
        %522 = vmatpush1.msra.mxu0 0.0
        %523 = vmatprep.subr.mxu0 0.0
        %524 = vmatpush1.msra.mxu0 0.0
        %525 = vmatprep.subr.mxu0 0.0
        %526 = vmatpush1.msra.mxu0 0.0
        %527 = vmatprep.subr.mxu0 0.0
        %528 = vmatpush1.msra.mxu0 %v396
        %529 = vmatprep.subr.mxu0 0.0
        %530 = vmatpush2.msra.mxu0 0.0
        %531 = vmatprep.subr.mxu0 0.0
        %532 = vmatpush2.msra.mxu0 0.0
        %533 = vmatprep.subr.mxu0 0.0
        %534 = vmatpush2.msra.mxu0 0.0
        %535 = vmatprep.subr.mxu0 0.0
        %536 = vmatpush2.msra.mxu0 0.0
        %537 = vmatprep.subr.mxu0 0.0
        %538 = vmatpush2.msra.mxu0 0.0
        %539 = vmatprep.subr.mxu0 0.0
        %540 = vmatpush2.msra.mxu0 0.0
        %541 = vmatprep.subr.mxu0 0.0
        %542 = vmatpush2.msra.mxu0 0.0
        %543 = vmatprep.subr.mxu0 0.0
        %544 = vmatpush2.msra.mxu0 0.0
        %545 = vmatprep.subr.mxu0 0.0
        %546 = vmatpush2.msra.mxu0 0.0
        %547 = vmatprep.subr.mxu0 0.0
        %548 = vmatpush2.msra.mxu0 0.0
        %549 = vmatprep.subr.mxu0 0.0
        %550 = vmatpush2.msra.mxu0 0.0
        %551 = vmatprep.subr.mxu0 0.0
        %552 = vmatpush2.msra.mxu0 0.0
        %553 = vmatprep.subr.mxu0 0.0
        %554 = vmatpush2.msra.mxu0 0.0
        %555 = vmatprep.subr.mxu0 0.0
        %556 = vmatpush2.msra.mxu0 0.0
        %557 = vmatprep.subr.mxu0 0.0
        %558 = vmatpush2.msra.mxu0 0.0
        %559 = vmatprep.subr.mxu0 0.0
        %560 = vmatpush2.msra.mxu0 0.0
        %561 = vmatprep.mubr.f32.mxu0 0.0
        %562 = vmatmul.mubr.f32.gmra.mxu0 %v495
        %v563 = vpop.f32.mrf.mxu0
        %v564 = vadd.f32 0.0, %v563
        %v565 = vpop.f32.mrf.mxu0
        %566 = vdwg.mxu0
        %567 = vst.msk [vmem:[%s377] sm:$0xff] %vm398, %v564
        %s568 = sand.u32 %s174, 1
        %s569 = scalar_lea.sflag [#allocation4], %s568
        %s570 = sand.u32 %s174, 1
        %s571 = smul.addr %s570, 8
        %s572 = scalar_lea.vmem [#allocation8], %s571
        %s573 = sand.u32 %s204, 1
        %s574 = scalar_lea.sflag [#allocation10], %s573
        %s575 = sand.u32 %s204, 1
        %s576 = smul.addr %s575, 8
        %s577 = scalar_lea.vmem [#allocation9], %s576
        // Predicated region
        $region49: #{tpu_custom_call.1} parent=35 // pred_check
          %p578 = pneg %p184
        $region50: #{tpu_custom_call.1} parent=35 // pred_check_branch
          %580 = sbr.rel (%p578) target = $region52
        $region51: #{tpu_custom_call.1} parent=35 // pred_region
          %s582 = ssub.s32 128, 128
          %583 = vsyncadd %s569, %s582
          %s584 = sadd.s32 %s36, %s35
          %s585 = smul.addr %s34, 2
          %s586 = sadd.s32 %s584, %s585
          %s587 = smul.addr %s586, 128
          %s588 = scalar_lea.hbm %s4, %s587
          %s590 = sshll.u32 %s572, 4
          %s591 = int_to_ptr.vmem [resolvable:$true] %s590
          %593 = dma.vmem_to_hbm [thread:$0]  %s591, 128, %s588, %s569
        $region52: #{tpu_custom_call.1} parent=35 // pred_fallthru
          _
        // Predicated region
        $region53: #{tpu_custom_call.1} parent=35 // pred_check
          %p594 = pneg %p214
        $region54: #{tpu_custom_call.1} parent=35 // pred_check_branch
          %596 = sbr.rel (%p594) target = $region56
        $region55: #{tpu_custom_call.1} parent=35 // pred_region
          %s598 = ssub.s32 128, 128
          %599 = vsyncadd %s574, %s598
          %s600 = sadd.s32 %s36, %s35
          %s601 = smul.addr %s34, 2
          %s602 = sadd.s32 %s600, %s601
          %s603 = smul.addr %s602, 128
          %s604 = scalar_lea.hbm %s5, %s603
          %s606 = sshll.u32 %s577, 4
          %s607 = int_to_ptr.vmem [resolvable:$true] %s606
          %609 = dma.vmem_to_hbm [thread:$0]  %s607, 128, %s604, %s574
        $region56: #{tpu_custom_call.1} parent=35 // pred_fallthru
          _
      $region36: #{tpu_custom_call.1} parent=5 // pred_fallthru
        _
      %p610 = scmp.le.s32.totalorder 2, %s24
      // Predicated region
      $region57: #{tpu_custom_call.1} parent=5 // pred_check
        %p611 = pneg %p610
      $region58: #{tpu_custom_call.1} parent=5 // pred_check_branch
        %613 = sbr.rel (%p611) target = $region60
      $region59: #{tpu_custom_call.1} parent=5 // pred_region
        %s614 = ssub.s32 %s24, 2
        // Predicated region
        $region61: #{tpu_custom_call.1} parent=59 // pred_check
          %p615 = pneg %p190
        $region62: #{tpu_custom_call.1} parent=59 // pred_check_branch
          %617 = sbr.rel (%p615) target = $region64
        $region63: #{tpu_custom_call.1} parent=59 // pred_region
          %s618 = sand.u32 %s175, 1
          %s619 = scalar_lea.sflag [#allocation4], %s618
          %s620 = sand.u32 %s175, 1
          %s621 = smul.addr %s620, 8
          %s622 = scalar_lea.vmem [#allocation8], %s621
          %623 = dma.done %s619, 128
        $region64: #{tpu_custom_call.1} parent=59 // pred_fallthru
          _
        // Predicated region
        $region65: #{tpu_custom_call.1} parent=59 // pred_check
          %p624 = pneg %p220
        $region66: #{tpu_custom_call.1} parent=59 // pred_check_branch
          %626 = sbr.rel (%p624) target = $region68
        $region67: #{tpu_custom_call.1} parent=59 // pred_region
          %s627 = sand.u32 %s205, 1
          %s628 = scalar_lea.sflag [#allocation10], %s627
          %s629 = sand.u32 %s205, 1
          %s630 = smul.addr %s629, 8
          %s631 = scalar_lea.vmem [#allocation9], %s630
          %632 = dma.done %s628, 128
        $region68: #{tpu_custom_call.1} parent=59 // pred_fallthru
          _
      $region60: #{tpu_custom_call.1} parent=5 // pred_fallthru
        _
    $region6: #{tpu_custom_call.1} parent=1 // loop_footer
      %s28 = sadd.s32 1, %s24
    $region7: #{tpu_custom_call.1} parent=1 // loop_footer_branch
      %23 = sbr.rel target = $region3
    $region8: #{tpu_custom_call.1} parent=1 // loop_exit
      _
    %633 = vsyncpa [#allocation3], 1
    %s634 = scalar_lea.sflag [#allocation3], 1
    %635 = vsyncpa %s634, 1
    %636 = vsyncpa [#allocation6], 1
    %s637 = scalar_lea.sflag [#allocation6], 1
    %638 = vsyncpa %s637, 1
    %639 = vsyncpa [#allocation4], 1
    %s640 = scalar_lea.sflag [#allocation4], 1
    %641 = vsyncpa %s640, 1
    %642 = vsyncpa [#allocation10], 1
    %s643 = scalar_lea.sflag [#allocation10], 1
    %644 = vsyncpa %s643, 1

</llo_original>
